<compile_context>
chip_gen: v6e
topology: v6e:2x2x1
jax: 0.10.0
libtpu: 0.0.40
codegen_flags: <defaults>
</compile_context>

<pallas_src>
import math

import jax
import jax.numpy as jnp
from jax.experimental import pallas as pl
from jax.experimental.pallas import tpu as pltpu

_LANE = 128
_SUBLANE = 8
_INV_SQRT2 = 1.0 / math.sqrt(2.0)


def _cdiv(a, b):
    return -(-a // b)


def _round_up(a, b):
    return _cdiv(a, b) * b


def _pack_factor(input_dim, emb_dim):
    """Smallest R such that R*input_dim and R*emb_dim are multiples of 128."""
    r1 = _LANE // math.gcd(input_dim, _LANE)
    r2 = _LANE // math.gcd(emb_dim, _LANE)
    return r1 * r2 // math.gcd(r1, r2)


def _sublane_multiple(*dtypes):
    """Second-minor block multiple: 8 for 32-bit, 16 for 16-bit dtypes."""
    m = _SUBLANE
    for dt in dtypes:
        itemsize = jnp.dtype(dt).itemsize
        m = max(m, _SUBLANE * max(4 // itemsize, 1))
    return m


def _embedfc_kernel(x_ref, w1_ref, b1_ref, w2_ref, b2_ref, out_ref):
    # One batch tile: (TM, R*in) @ (R*in, R*emb) -> GELU -> @ (R*emb, R*emb).
    # Weights are block-diagonal so this is exactly R independent row-wise
    # Linear->GELU->Linear evaluations, just presented lane-dense.
    x = x_ref[...].astype(w1_ref.dtype)          # in-kernel cast: rides VPU slack
    h = jnp.dot(x, w1_ref[...], preferred_element_type=jnp.float32) + b1_ref[...]
    # Exact (erf-based) GELU in f32 — matches PyTorch nn.GELU() default and is
    # safe on v5e's f32-only VPU/EUP.
    h = 0.5 * h * (1.0 + jax.lax.erf(h * _INV_SQRT2))
    y = jnp.dot(h.astype(w2_ref.dtype), w2_ref[...],
                preferred_element_type=jnp.float32) + b2_ref[...]
    out_ref[...] = y.astype(out_ref.dtype)


def prepare_embedfc_params(w1, b1, w2, b2, *, compute_dtype=jnp.bfloat16):
    """One-time parameter preparation (hoisted out of the forward path).

    w1: (emb_dim, input_dim)  PyTorch Linear weight layout
    b1: (emb_dim,)
    w2: (emb_dim, emb_dim)
    b2: (emb_dim,)

    Returns transposed, R-way block-diagonal weights (kernel sees lane-dense
    128/256-wide operands) plus R-tiled f32 biases.  compute_dtype=bfloat16 is
    the recommended (and on v5e effectively required) matmul-operand dtype:
    the block-diag packing inflates MXU work R-fold, and f32 operands would
    flip v5e compute-bound.  f32 accumulation is kept regardless.
    """
    emb_dim, input_dim = w1.shape
    R = _pack_factor(input_dim, emb_dim)
    eye = jnp.eye(R, dtype=jnp.float32)
    # kron(I_R, A) == block-diag(A, ..., A): packed matmul == R row-wise matmuls.
    W1 = jnp.kron(eye, jnp.transpose(w1).astype(jnp.float32)).astype(compute_dtype)
    W2 = jnp.kron(eye, jnp.transpose(w2).astype(jnp.float32)).astype(compute_dtype)
    B1 = jnp.tile(b1.astype(jnp.float32), R).reshape(1, R * emb_dim)
    B2 = jnp.tile(b2.astype(jnp.float32), R).reshape(1, R * emb_dim)
    return dict(W1=W1, B1=B1, W2=W2, B2=B2,
                input_dim=input_dim, emb_dim=emb_dim, pack=R)


def embed_fc(x, params, *, out_dtype=None, tile_rows=16384):
    """EmbedFC forward: x.view(-1, input_dim) -> Linear -> GELU -> Linear.

    x may have any shape whose total size is a multiple of input_dim (any
    float dtype; bf16 input is supported end-to-end).  Returns (B, emb_dim)
    with B = x.size // input_dim, in `out_dtype` (default: x.dtype).
    """
    input_dim = params["input_dim"]
    emb_dim = params["emb_dim"]
    R = params["pack"]
    W1, B1, W2, B2 = params["W1"], params["B1"], params["W2"], params["B2"]

    xf = x.reshape(-1, input_dim)                  # == torch x.view(-1, input_dim)
    B = xf.shape[0]
    out_dtype = jnp.dtype(out_dtype) if out_dtype is not None else xf.dtype

    kin = R * input_dim                            # lane-dense widths (mult. of 128)
    kout = R * emb_dim

    # Pad only up to a multiple of R (<= R-1 rows), and only when B % R != 0.
    # The partial LAST GRID TILE is handled by Pallas masking, not by padding,
    # so there is no whole-array extra HBM pass for typical batch sizes.
    rem = B % R
    if rem:
        xf = jnp.concatenate(
            [xf, jnp.zeros((R - rem, input_dim), xf.dtype)], axis=0)
    needed = xf.shape[0] // R                      # packed rows
    xp = xf.reshape(needed, kin)                   # free row-major reshape

    # Tile size in packed rows.  Second-minor block multiple is dtype-aware
    # (8 for f32 I/O, 16 when bf16 I/O is involved).
    sub = _sublane_multiple(xp.dtype, out_dtype)
    if needed <= sub:
        tm = needed                                # block == full array dim: legal
    else:
        tm_cap = max(sub, _round_up(max(tile_rows // R, 1), sub))
        # v7x: cap tm so the "parallel" grid has >= 2 tiles and both
        # TensorCores get work; harmless on single-TC v5e/v6e.
        tm_split = _round_up(_cdiv(needed, 2), sub)
        tm = max(sub, min(tm_cap, tm_split))
    grid = _cdiv(needed, tm)

    rows = grid * tm                               # rows actually pushed through MXU
    cost = pl.CostEstimate(
        # Real (block-diag-inflated) MXU FLOPs, not the R-times-smaller
        # logical count, so XLA schedules against the true kernel duration.
        flops=2 * rows * (kin * kout + kout * kout),
        transcendentals=rows * kout,
        bytes_accessed=int(xp.size * xp.dtype.itemsize
                           + W1.size * W1.dtype.itemsize
                           + W2.size * W2.dtype.itemsize
                           + (B1.size + B2.size) * 4
                           + needed * kout * jnp.dtype(out_dtype).itemsize),
    )

    # NOTE: W1/b1/W2/b2 use constant index_maps so Pallas fetches them once and
    # keeps them VMEM-resident; their (double-buffered) footprint is < 0.5 MiB,
    # so no single-buffering / vmem_limit override is needed on any generation.
    out_p = pl.pallas_call(
        _embedfc_kernel,
        out_shape=jax.ShapeDtypeStruct((needed, kout), out_dtype),
        grid=(grid,),
        in_specs=[
            pl.BlockSpec((tm, kin), lambda i: (i, 0)),     # x tile: streamed
            pl.BlockSpec((kin, kout), lambda i: (0, 0)),   # W1: VMEM-resident
            pl.BlockSpec((1, kout), lambda i: (0, 0)),     # b1
            pl.BlockSpec((kout, kout), lambda i: (0, 0)),  # W2: VMEM-resident
            pl.BlockSpec((1, kout), lambda i: (0, 0)),     # b2
        ],
        out_specs=pl.BlockSpec((tm, kout), lambda i: (i, 0)),
        compiler_params=pltpu.CompilerParams(
            dimension_semantics=("parallel",)),            # independent batch tiles
        cost_estimate=cost,
    )(xp, W1, B1, W2, B2)

    out = out_p.reshape(needed * R, emb_dim)       # free reshape back to rows
    if needed * R != B:                            # drop the (<= R-1) padded rows
        out = out[:B]
    return out


# ----------------------------------------------------------------------------


def _init_linear(key, out_features, in_features, dtype=jnp.float32):
    # Deterministic PyTorch-style init: U(-1/sqrt(fan_in), 1/sqrt(fan_in))
    kw, kb = jax.random.split(key)
    bound = 1.0 / math.sqrt(in_features)
    w = jax.random.uniform(kw, (out_features, in_features), dtype,
                           minval=-bound, maxval=bound)
    b = jax.random.uniform(kb, (out_features,), dtype,
                           minval=-bound, maxval=bound)
    return w, b


def _reference(x, w1, b1, w2, b2, input_dim):
    xf = x.reshape(-1, input_dim).astype(jnp.float32)
    h = xf @ w1.T + b1
    h = 0.5 * h * (1.0 + jax.lax.erf(h * _INV_SQRT2))
    return h @ w2.T + b2


if __name__ == "__main__":
    input_dim, emb_dim = 16, 32

    key = jax.random.PRNGKey(0)
    kx, kx2, kx3, k1, k2 = jax.random.split(key, 5)

    w1, b1 = _init_linear(k1, emb_dim, input_dim)
    w2, b2 = _init_linear(k2, emb_dim, emb_dim)

    # Parameters prepared ONCE (transpose + block-diag pack), reused every call.
    params_bf16 = prepare_embedfc_params(w1, b1, w2, b2)  # default bf16 operands
    params_f32 = prepare_embedfc_params(w1, b1, w2, b2, compute_dtype=jnp.float32)

    # --- check 1: small batch (B=8 rows), all-f32 path, tight tolerance ------
    x = jax.random.normal(kx, (2, 4, input_dim), dtype=jnp.float32)
    out = embed_fc(x, params_f32)
    jax.block_until_ready(out)
    ref = _reference(x, w1, b1, w2, b2, input_dim)
    assert out.shape == (8, emb_dim)
    assert jnp.allclose(out, ref, atol=1e-5, rtol=1e-5)

    # --- check 2: default bf16-operand MXU path (v5e/v6e/v7x fast path) ------
    out_b = embed_fc(x, params_bf16)
    jax.block_until_ready(out_b)
    assert jnp.allclose(out_b, ref, atol=3e-2, rtol=3e-2)

    # --- check 3: bf16 end-to-end I/O (halves HBM traffic), B=256 ------------
    xb = jax.random.normal(kx2, (16, 16, input_dim), dtype=jnp.bfloat16)
    out_bb = embed_fc(xb, params_bf16, out_dtype=jnp.bfloat16)
    jax.block_until_ready(out_bb)
    refb = _reference(xb, w1, b1, w2, b2, input_dim)
    assert out_bb.dtype == jnp.bfloat16
    assert out_bb.shape == (256, emb_dim)
    assert jnp.allclose(out_bb.astype(jnp.float32), refb, atol=5e-2, rtol=5e-2)

    # --- check 4: multi-tile grid with a partial (masked) last tile ----------
    x2 = jax.random.normal(kx3, (25, 8, input_dim), dtype=jnp.float32)  # B = 200
    out2 = embed_fc(x2, params_f32, tile_rows=64)   # tm=8 packed rows -> grid=4
    jax.block_until_ready(out2)
    ref2 = _reference(x2, w1, b1, w2, b2, input_dim)
    assert out2.shape == (200, emb_dim)
    assert jnp.allclose(out2, ref2, atol=1e-5, rtol=1e-5)

    # --- check 5: B not a multiple of R (tiny <=R-1 row pad, sliced back) ----
    x3 = jax.random.normal(kx, (10, input_dim), dtype=jnp.float32)      # B = 10
    out3 = embed_fc(x3, params_f32)
    jax.block_until_ready(out3)
    ref3 = _reference(x3, w1, b1, w2, b2, input_dim)
    assert out3.shape == (10, emb_dim)
    assert jnp.allclose(out3, ref3, atol=1e-5, rtol=1e-5)

    print("KERNEL_OK")
</pallas_src>

<mosaic_0001>
module attributes {stable_mosaic.version = 11 : i64} {
  func.func @_embedfc_kernel(%arg0: i32, %arg1: memref<1x128xf32, #tpu.memory_space<vmem>>, %arg2: memref<128x256xf32, #tpu.memory_space<vmem>>, %arg3: memref<1x256xf32, #tpu.memory_space<vmem>>, %arg4: memref<256x256xf32, #tpu.memory_space<vmem>>, %arg5: memref<1x256xf32, #tpu.memory_space<vmem>>, %arg6: memref<1x256xf32, #tpu.memory_space<vmem>>) attributes {dimension_semantics = [#tpu.dimension_semantics<parallel>], iteration_bounds = array<i64: 1>, scalar_prefetch = 0 : i64, scratch_operands = 0 : i64, tpu.core_type = #tpu.core_type<tc>, window_params = [{transform_indices = @transform_0, window_bounds = array<i64: 1, 128>}, {pipeline_mode = #tpu.pipeline_mode<synchronous>, transform_indices = @transform_1, window_bounds = array<i64: 128, 256>}, {pipeline_mode = #tpu.pipeline_mode<synchronous>, transform_indices = @transform_2, window_bounds = array<i64: 1, 256>}, {pipeline_mode = #tpu.pipeline_mode<synchronous>, transform_indices = @transform_3, window_bounds = array<i64: 256, 256>}, {pipeline_mode = #tpu.pipeline_mode<synchronous>, transform_indices = @transform_4, window_bounds = array<i64: 1, 256>}, {transform_indices = @transform_5, window_bounds = array<i64: 1, 256>}]} {
    %c0 = arith.constant 0 : index
    %c0_0 = arith.constant 0 : index
    %0 = vector.load %arg1[%c0, %c0_0] : memref<1x128xf32, #tpu.memory_space<vmem>>, vector<1x128xf32>
    %c0_1 = arith.constant 0 : index
    %c0_2 = arith.constant 0 : index
    %1 = vector.load %arg2[%c0_1, %c0_2] : memref<128x256xf32, #tpu.memory_space<vmem>>, vector<128x256xf32>
    %cst = arith.constant dense<0.000000e+00> : vector<1x256xf32>
    %2 = tpu.matmul %0, %1, %cst {dimension_numbers = #tpu.dot_dimension_numbers<[1], [0], [0], [1], [0, 0, 1, 1], [], []>} : vector<1x128xf32>, vector<128x256xf32>, vector<1x256xf32> -> vector<1x256xf32>
    %c0_3 = arith.constant 0 : index
    %c0_4 = arith.constant 0 : index
    %3 = vector.load %arg3[%c0_3, %c0_4] : memref<1x256xf32, #tpu.memory_space<vmem>>, vector<1x256xf32>
    %4 = arith.addf %2, %3 : vector<1x256xf32>
    %cst_5 = arith.constant 5.000000e-01 : f32
    %5 = vector.broadcast %cst_5 : f32 to vector<1x256xf32>
    %6 = arith.mulf %5, %4 : vector<1x256xf32>
    %cst_6 = arith.constant 0.707106769 : f32
    %7 = vector.broadcast %cst_6 : f32 to vector<1x256xf32>
    %8 = arith.mulf %4, %7 : vector<1x256xf32>
    %9 = math.erf %8 : vector<1x256xf32>
    %cst_7 = arith.constant 1.000000e+00 : f32
    %10 = vector.broadcast %cst_7 : f32 to vector<1x256xf32>
    %11 = arith.addf %10, %9 : vector<1x256xf32>
    %12 = arith.mulf %6, %11 : vector<1x256xf32>
    %c0_8 = arith.constant 0 : index
    %c0_9 = arith.constant 0 : index
    %13 = vector.load %arg4[%c0_8, %c0_9] : memref<256x256xf32, #tpu.memory_space<vmem>>, vector<256x256xf32>
    %cst_10 = arith.constant dense<0.000000e+00> : vector<1x256xf32>
    %14 = tpu.matmul %12, %13, %cst_10 {dimension_numbers = #tpu.dot_dimension_numbers<[1], [0], [0], [1], [0, 0, 1, 1], [], []>} : vector<1x256xf32>, vector<256x256xf32>, vector<1x256xf32> -> vector<1x256xf32>
    %c0_11 = arith.constant 0 : index
    %c0_12 = arith.constant 0 : index
    %15 = vector.load %arg5[%c0_11, %c0_12] : memref<1x256xf32, #tpu.memory_space<vmem>>, vector<1x256xf32>
    %16 = arith.addf %14, %15 : vector<1x256xf32>
    %c0_13 = arith.constant 0 : index
    %c0_14 = arith.constant 0 : index
    %17 = vector.load %arg6[%c0_13, %c0_14] : memref<1x256xf32, #tpu.memory_space<vmem>>, vector<1x256xf32>
    tpu.vector_store %arg6[%c0_13, %c0_14], %16 {strides = array<i32>} : memref<1x256xf32, #tpu.memory_space<vmem>>, vector<1x256xf32>,
    return
  }
  func.func @transform_0(%arg0: i32) -> (i32, i32) {
    %c0_i32 = arith.constant 0 : i32
    %c0_i32_0 = arith.constant 0 : i32
    return %arg0, %c0_i32 : i32, i32
  }
  func.func @transform_1(%arg0: i32) -> (i32, i32) {
    %c0_i32 = arith.constant 0 : i32
    %c0_i32_0 = arith.constant 0 : i32
    %c0_i32_1 = arith.constant 0 : i32
    return %c0_i32, %c0_i32_0 : i32, i32
  }
  func.func @transform_2(%arg0: i32) -> (i32, i32) {
    %c0_i32 = arith.constant 0 : i32
    %c0_i32_0 = arith.constant 0 : i32
    %c0_i32_1 = arith.constant 0 : i32
    return %c0_i32, %c0_i32_0 : i32, i32
  }
  func.func @transform_3(%arg0: i32) -> (i32, i32) {
    %c0_i32 = arith.constant 0 : i32
    %c0_i32_0 = arith.constant 0 : i32
    %c0_i32_1 = arith.constant 0 : i32
    return %c0_i32, %c0_i32_0 : i32, i32
  }
  func.func @transform_4(%arg0: i32) -> (i32, i32) {
    %c0_i32 = arith.constant 0 : i32
    %c0_i32_0 = arith.constant 0 : i32
    %c0_i32_1 = arith.constant 0 : i32
    return %c0_i32, %c0_i32_0 : i32, i32
  }
  func.func @transform_5(%arg0: i32) -> (i32, i32) {
    %c0_i32 = arith.constant 0 : i32
    %c0_i32_0 = arith.constant 0 : i32
    return %arg0, %c0_i32 : i32, i32
  }
}

</mosaic_0001>

<llo_original>
// kernel: tpu_custom_call.1
$region0: #{tpu_custom_call.1}
  #allocation0 [shape = 'u32[]', space=smem, size = 0x4, offset = 0x4, fixed_abs, tag = 'smem constant byte address 0x4 - core index']
  #allocation1 [shape = 'u32[144,128]{1,0:T(1,128)}', space=vmem, size = 0x12000, scoped, tag = 'internal scratch']
  %s0 = inlined_call_operand.hbm [shape: f32[1,128], index: 0, kind: input, shape index: {}]
  %s1 = inlined_call_operand.hbm [shape: f32[128,256], index: 1, kind: input, shape index: {}]
  %s2 = inlined_call_operand.vmem [shape: f32[1,256], index: 2, kind: input, shape index: {}]
  %s3 = inlined_call_operand.hbm [shape: f32[256,256], index: 3, kind: input, shape index: {}]
  %s4 = inlined_call_operand.vmem [shape: f32[1,256], index: 4, kind: input, shape index: {}]
  %s5 = inlined_call_operand.hbm [shape: f32[1,256], index: 5, kind: output, shape index: {}]
  %s6 = sld [smem:[#allocation0]]
  $region42: #{tpu_custom_call.1} parent=0
    _
  %s8 = ssub.s32 1, %s6
  %s9 = scalar_select 0, %s8, %s6
  $region1: #{tpu_custom_call.1} parent=0
    #allocation2 [shape = 'u8[512]{0}', space=vmem, size = 0x400, scoped, tag = 'input window, operand 0, single buffered']
    #allocation3 [shape = 's32[1]{0}', space=sflag, size = 0x4, scoped, tag = 'scoped memory for tpu_custom_call.1']
    #allocation4 [shape = 's32[1]{0}', space=sflag, size = 0x4, scoped, tag = 'scoped memory for tpu_custom_call.1']
    #allocation5 [shape = 'u8[131072]{0}', space=vmem, size = 0x20000, scoped, tag = 'input window, operand 1, single buffered']
    #allocation6 [shape = 's32[1]{0}', space=sflag, size = 0x4, scoped, tag = 'scoped memory for tpu_custom_call.1']
    #allocation7 [shape = 'u8[262144]{0}', space=vmem, size = 0x40000, scoped, tag = 'input window, operand 3, single buffered']
    #allocation8 [shape = 'u8[1024]{0}', space=vmem, size = 0x400, scoped, tag = 'output window, operand 0, single buffered']
    %10 = vsyncpa [#allocation3], 0
    %11 = vsyncpa [#allocation6], 0
    %12 = vsyncpa [#allocation4], 0
    // Predicated region
    $region2: #{tpu_custom_call.1} parent=1 // pred_check
      _
    $region3: #{tpu_custom_call.1} parent=1 // pred_check_branch
      %14 = sbr.rel (0) target = $region5
    $region4: #{tpu_custom_call.1} parent=1 // pred_region
      %s16 = ssub.s32 16, 16
      %17 = vsyncadd [#allocation3], %s16
      %s19 = sshll.u32 [#allocation2], 4
      %s20 = int_to_ptr.vmem [resolvable:$true] %s19
      %22 = dma.hbm_to_vmem [thread:$0]  %s0, 16, %s20, [#allocation3]
    $region5: #{tpu_custom_call.1} parent=1 // pred_fallthru
      _
    // Predicated region
    $region6: #{tpu_custom_call.1} parent=1 // pred_check
      _
    $region7: #{tpu_custom_call.1} parent=1 // pred_check_branch
      %24 = sbr.rel (0) target = $region9
    $region8: #{tpu_custom_call.1} parent=1 // pred_region
      %s26 = ssub.s32 4096, 4096
      %27 = vsyncadd [#allocation6], %s26
      %s28 = sshll.u32 [#allocation5], 4
      %s29 = int_to_ptr.vmem [resolvable:$true] %s28
      %34 = dma.hbm_to_vmem [thread:$0]  %s1, 4096, %s29, [#allocation6], 256, 256, 16
    $region9: #{tpu_custom_call.1} parent=1 // pred_fallthru
      _
    // Predicated region
    $region10: #{tpu_custom_call.1} parent=1 // pred_check
      _
    $region11: #{tpu_custom_call.1} parent=1 // pred_check_branch
      %36 = sbr.rel (0) target = $region13
    $region12: #{tpu_custom_call.1} parent=1 // pred_region
      _
    $region13: #{tpu_custom_call.1} parent=1 // pred_fallthru
      _
    // Predicated region
    $region14: #{tpu_custom_call.1} parent=1 // pred_check
      _
    $region15: #{tpu_custom_call.1} parent=1 // pred_check_branch
      %38 = sbr.rel (0) target = $region17
    $region16: #{tpu_custom_call.1} parent=1 // pred_region
      %s40 = ssub.s32 8192, 8192
      %41 = vsyncadd [#allocation6], %s40
      %s42 = sshll.u32 [#allocation7], 4
      %s43 = int_to_ptr.vmem [resolvable:$true] %s42
      %48 = dma.hbm_to_vmem [thread:$0]  %s3, 8192, %s43, [#allocation6], 256, 256, 16
    $region17: #{tpu_custom_call.1} parent=1 // pred_fallthru
      _
    // Predicated region
    $region18: #{tpu_custom_call.1} parent=1 // pred_check
      _
    $region19: #{tpu_custom_call.1} parent=1 // pred_check_branch
      %50 = sbr.rel (0) target = $region21
    $region20: #{tpu_custom_call.1} parent=1 // pred_region
      _
    $region21: #{tpu_custom_call.1} parent=1 // pred_fallthru
      _
    // Predicated region
    $region22: #{tpu_custom_call.1} parent=1 // pred_check
      _
    $region23: #{tpu_custom_call.1} parent=1 // pred_check_branch
      %52 = sbr.rel (0) target = $region25
    $region24: #{tpu_custom_call.1} parent=1 // pred_region
      %53 = dma.done [#allocation3], 16
    $region25: #{tpu_custom_call.1} parent=1 // pred_fallthru
      _
    // Predicated region
    $region26: #{tpu_custom_call.1} parent=1 // pred_check
      _
    $region27: #{tpu_custom_call.1} parent=1 // pred_check_branch
      %55 = sbr.rel (0) target = $region29
    $region28: #{tpu_custom_call.1} parent=1 // pred_region
      %56 = dma.done [#allocation6], 4096
    $region29: #{tpu_custom_call.1} parent=1 // pred_fallthru
      _
    // Predicated region
    $region30: #{tpu_custom_call.1} parent=1 // pred_check
      _
    $region31: #{tpu_custom_call.1} parent=1 // pred_check_branch
      %58 = sbr.rel (0) target = $region33
    $region32: #{tpu_custom_call.1} parent=1 // pred_region
      %59 = dma.done [#allocation6], 8192
    $region33: #{tpu_custom_call.1} parent=1 // pred_fallthru
      _
    %v60 = vld [vmem:[#allocation2] sm:$0x1]
    %v61 = vld [vmem:[#allocation5] sm:$0xff]
    %v62 = vld [vmem:[#allocation5 + $0x8] sm:$0xff]
    %v63 = vld [vmem:[#allocation5 + $0x10] sm:$0xff]
    %v64 = vld [vmem:[#allocation5 + $0x18] sm:$0xff]
    %v65 = vld [vmem:[#allocation5 + $0x20] sm:$0xff]
    %v66 = vld [vmem:[#allocation5 + $0x28] sm:$0xff]
    %v67 = vld [vmem:[#allocation5 + $0x30] sm:$0xff]
    %v68 = vld [vmem:[#allocation5 + $0x38] sm:$0xff]
    %v69 = vld [vmem:[#allocation5 + $0x40] sm:$0xff]
    %v70 = vld [vmem:[#allocation5 + $0x48] sm:$0xff]
    %v71 = vld [vmem:[#allocation5 + $0x50] sm:$0xff]
    %v72 = vld [vmem:[#allocation5 + $0x58] sm:$0xff]
    %v73 = vld [vmem:[#allocation5 + $0x60] sm:$0xff]
    %v74 = vld [vmem:[#allocation5 + $0x68] sm:$0xff]
    %v75 = vld [vmem:[#allocation5 + $0x70] sm:$0xff]
    %v76 = vld [vmem:[#allocation5 + $0x78] sm:$0xff]
    %v77 = vld [vmem:[#allocation5 + $0x80] sm:$0xff]
    %v78 = vld [vmem:[#allocation5 + $0x88] sm:$0xff]
    %v79 = vld [vmem:[#allocation5 + $0x90] sm:$0xff]
    %v80 = vld [vmem:[#allocation5 + $0x98] sm:$0xff]
    %v81 = vld [vmem:[#allocation5 + $0xa0] sm:$0xff]
    %v82 = vld [vmem:[#allocation5 + $0xa8] sm:$0xff]
    %v83 = vld [vmem:[#allocation5 + $0xb0] sm:$0xff]
    %v84 = vld [vmem:[#allocation5 + $0xb8] sm:$0xff]
    %v85 = vld [vmem:[#allocation5 + $0xc0] sm:$0xff]
    %v86 = vld [vmem:[#allocation5 + $0xc8] sm:$0xff]
    %v87 = vld [vmem:[#allocation5 + $0xd0] sm:$0xff]
    %v88 = vld [vmem:[#allocation5 + $0xd8] sm:$0xff]
    %v89 = vld [vmem:[#allocation5 + $0xe0] sm:$0xff]
    %v90 = vld [vmem:[#allocation5 + $0xe8] sm:$0xff]
    %v91 = vld [vmem:[#allocation5 + $0xf0] sm:$0xff]
    %v92 = vld [vmem:[#allocation5 + $0xf8] sm:$0xff]
    %v93 = vld [vmem:[%s2] sm:$0x3]
    %v95 = vlaneseq
    %v96 = vshrl.u32 %v95, 7
    %v97 = vsub.s32 0, %v96
    %v98 = vrot.slane %v93, %v97
    %v99 = vlaneseq
    %v100 = vshrl.u32 %v99, 7
    %v101 = vsub.s32 1, %v100
    %v102 = vrot.slane %v93, %v101
    %105 = vmatprep.subr.mxu0 %v92
    %106 = vmatpush1.msra.mxu0 %v91
    %107 = vmatprep.subr.mxu0 %v90
    %108 = vmatpush1.msra.mxu0 %v89
    %109 = vmatprep.subr.mxu0 %v88
    %110 = vmatpush1.msra.mxu0 %v87
    %111 = vmatprep.subr.mxu0 %v86
    %112 = vmatpush1.msra.mxu0 %v85
    %113 = vmatprep.subr.mxu0 %v84
    %114 = vmatpush1.msra.mxu0 %v83
    %115 = vmatprep.subr.mxu0 %v82
    %116 = vmatpush1.msra.mxu0 %v81
    %117 = vmatprep.subr.mxu0 %v80
    %118 = vmatpush1.msra.mxu0 %v79
    %119 = vmatprep.subr.mxu0 %v78
    %120 = vmatpush1.msra.mxu0 %v77
    %121 = vmatprep.subr.mxu0 %v76
    %122 = vmatpush1.msra.mxu0 %v75
    %123 = vmatprep.subr.mxu0 %v74
    %124 = vmatpush1.msra.mxu0 %v73
    %125 = vmatprep.subr.mxu0 %v72
    %126 = vmatpush1.msra.mxu0 %v71
    %127 = vmatprep.subr.mxu0 %v70
    %128 = vmatpush1.msra.mxu0 %v69
    %129 = vmatprep.subr.mxu0 %v68
    %130 = vmatpush1.msra.mxu0 %v67
    %131 = vmatprep.subr.mxu0 %v66
    %132 = vmatpush1.msra.mxu0 %v65
    %133 = vmatprep.subr.mxu0 %v64
    %134 = vmatpush1.msra.mxu0 %v63
    %135 = vmatprep.subr.mxu0 %v62
    %136 = vmatpush1.msra.mxu0 %v61
    %137 = vmatprep.subr.mxu0 0.0
    %138 = vmatpush2.msra.mxu0 0.0
    %139 = vmatprep.subr.mxu0 0.0
    %140 = vmatpush2.msra.mxu0 0.0
    %141 = vmatprep.subr.mxu0 0.0
    %142 = vmatpush2.msra.mxu0 0.0
    %143 = vmatprep.subr.mxu0 0.0
    %144 = vmatpush2.msra.mxu0 0.0
    %145 = vmatprep.subr.mxu0 0.0
    %146 = vmatpush2.msra.mxu0 0.0
    %147 = vmatprep.subr.mxu0 0.0
    %148 = vmatpush2.msra.mxu0 0.0
    %149 = vmatprep.subr.mxu0 0.0
    %150 = vmatpush2.msra.mxu0 0.0
    %151 = vmatprep.subr.mxu0 0.0
    %152 = vmatpush2.msra.mxu0 0.0
    %153 = vmatprep.subr.mxu0 0.0
    %154 = vmatpush2.msra.mxu0 0.0
    %155 = vmatprep.subr.mxu0 0.0
    %156 = vmatpush2.msra.mxu0 0.0
    %157 = vmatprep.subr.mxu0 0.0
    %158 = vmatpush2.msra.mxu0 0.0
    %159 = vmatprep.subr.mxu0 0.0
    %160 = vmatpush2.msra.mxu0 0.0
    %161 = vmatprep.subr.mxu0 0.0
    %162 = vmatpush2.msra.mxu0 0.0
    %163 = vmatprep.subr.mxu0 0.0
    %164 = vmatpush2.msra.mxu0 0.0
    %165 = vmatprep.subr.mxu0 0.0
    %166 = vmatpush2.msra.mxu0 0.0
    %167 = vmatprep.subr.mxu0 0.0
    %168 = vmatpush2.msra.mxu0 0.0
    %169 = vmatprep.mubr.f32.mxu0 0.0
    %170 = vmatmul.mubr.f32.gmra.mxu0 %v60
    %v171 = vpop.f32.mrf.mxu0
    %v172 = vadd.f32 %v98, %v171
    %v173 = vpop.f32.mrf.mxu0
    %v174 = vadd.f32 %v102, %v173
    %175 = vdwg.mxu0
    %v176 = vmul.f32 %v172, 0.5
    %v177 = vmul.f32 %v174, 0.5
    %v178 = vmul.f32 %v172, 0.70710677
    %v179 = vmul.f32 %v174, 0.70710677
    %v180 = verf.f32.pop %v178
    %v181 = verf.f32.pop %v179
    %v182 = vadd.f32 %v180, 1.0
    %v183 = vadd.f32 %v181, 1.0
    %v184 = vmul.f32 %v176, %v182
    %v185 = vmul.f32 %v177, %v183
    %v186 = vld [vmem:[#allocation7] sm:$0xff]
    %v187 = vld [vmem:[#allocation7 + $0x8] sm:$0xff]
    %v188 = vld [vmem:[#allocation7 + $0x10] sm:$0xff]
    %v189 = vld [vmem:[#allocation7 + $0x18] sm:$0xff]
    %v190 = vld [vmem:[#allocation7 + $0x20] sm:$0xff]
    %v191 = vld [vmem:[#allocation7 + $0x28] sm:$0xff]
    %v192 = vld [vmem:[#allocation7 + $0x30] sm:$0xff]
    %v193 = vld [vmem:[#allocation7 + $0x38] sm:$0xff]
    %v194 = vld [vmem:[#allocation7 + $0x40] sm:$0xff]
    %v195 = vld [vmem:[#allocation7 + $0x48] sm:$0xff]
    %v196 = vld [vmem:[#allocation7 + $0x50] sm:$0xff]
    %v197 = vld [vmem:[#allocation7 + $0x58] sm:$0xff]
    %v198 = vld [vmem:[#allocation7 + $0x60] sm:$0xff]
    %v199 = vld [vmem:[#allocation7 + $0x68] sm:$0xff]
    %v200 = vld [vmem:[#allocation7 + $0x70] sm:$0xff]
    %v201 = vld [vmem:[#allocation7 + $0x78] sm:$0xff]
    %v202 = vld [vmem:[#allocation7 + $0x80] sm:$0xff]
    %v203 = vld [vmem:[#allocation7 + $0x88] sm:$0xff]
    %v204 = vld [vmem:[#allocation7 + $0x90] sm:$0xff]
    %v205 = vld [vmem:[#allocation7 + $0x98] sm:$0xff]
    %v206 = vld [vmem:[#allocation7 + $0xa0] sm:$0xff]
    %v207 = vld [vmem:[#allocation7 + $0xa8] sm:$0xff]
    %v208 = vld [vmem:[#allocation7 + $0xb0] sm:$0xff]
    %v209 = vld [vmem:[#allocation7 + $0xb8] sm:$0xff]
    %v210 = vld [vmem:[#allocation7 + $0xc0] sm:$0xff]
    %v211 = vld [vmem:[#allocation7 + $0xc8] sm:$0xff]
    %v212 = vld [vmem:[#allocation7 + $0xd0] sm:$0xff]
    %v213 = vld [vmem:[#allocation7 + $0xd8] sm:$0xff]
    %v214 = vld [vmem:[#allocation7 + $0xe0] sm:$0xff]
    %v215 = vld [vmem:[#allocation7 + $0xe8] sm:$0xff]
    %v216 = vld [vmem:[#allocation7 + $0xf0] sm:$0xff]
    %v217 = vld [vmem:[#allocation7 + $0xf8] sm:$0xff]
    %v218 = vld [vmem:[#allocation7 + $0x100] sm:$0xff]
    %v219 = vld [vmem:[#allocation7 + $0x108] sm:$0xff]
    %v220 = vld [vmem:[#allocation7 + $0x110] sm:$0xff]
    %v221 = vld [vmem:[#allocation7 + $0x118] sm:$0xff]
    %v222 = vld [vmem:[#allocation7 + $0x120] sm:$0xff]
    %v223 = vld [vmem:[#allocation7 + $0x128] sm:$0xff]
    %v224 = vld [vmem:[#allocation7 + $0x130] sm:$0xff]
    %v225 = vld [vmem:[#allocation7 + $0x138] sm:$0xff]
    %v226 = vld [vmem:[#allocation7 + $0x140] sm:$0xff]
    %v227 = vld [vmem:[#allocation7 + $0x148] sm:$0xff]
    %v228 = vld [vmem:[#allocation7 + $0x150] sm:$0xff]
    %v229 = vld [vmem:[#allocation7 + $0x158] sm:$0xff]
    %v230 = vld [vmem:[#allocation7 + $0x160] sm:$0xff]
    %v231 = vld [vmem:[#allocation7 + $0x168] sm:$0xff]
    %v232 = vld [vmem:[#allocation7 + $0x170] sm:$0xff]
    %v233 = vld [vmem:[#allocation7 + $0x178] sm:$0xff]
    %v234 = vld [vmem:[#allocation7 + $0x180] sm:$0xff]
    %v235 = vld [vmem:[#allocation7 + $0x188] sm:$0xff]
    %v236 = vld [vmem:[#allocation7 + $0x190] sm:$0xff]
    %v237 = vld [vmem:[#allocation7 + $0x198] sm:$0xff]
    %v238 = vld [vmem:[#allocation7 + $0x1a0] sm:$0xff]
    %v239 = vld [vmem:[#allocation7 + $0x1a8] sm:$0xff]
    %v240 = vld [vmem:[#allocation7 + $0x1b0] sm:$0xff]
    %v241 = vld [vmem:[#allocation7 + $0x1b8] sm:$0xff]
    %v242 = vld [vmem:[#allocation7 + $0x1c0] sm:$0xff]
    %v243 = vld [vmem:[#allocation7 + $0x1c8] sm:$0xff]
    %v244 = vld [vmem:[#allocation7 + $0x1d0] sm:$0xff]
    %v245 = vld [vmem:[#allocation7 + $0x1d8] sm:$0xff]
    %v246 = vld [vmem:[#allocation7 + $0x1e0] sm:$0xff]
    %v247 = vld [vmem:[#allocation7 + $0x1e8] sm:$0xff]
    %v248 = vld [vmem:[#allocation7 + $0x1f0] sm:$0xff]
    %v249 = vld [vmem:[#allocation7 + $0x1f8] sm:$0xff]
    %v250 = vld [vmem:[%s4] sm:$0x3]
    %v252 = vlaneseq
    %v253 = vshrl.u32 %v252, 7
    %v254 = vsub.s32 0, %v253
    %v255 = vrot.slane %v250, %v254
    %v256 = vlaneseq
    %v257 = vshrl.u32 %v256, 7
    %v258 = vsub.s32 1, %v257
    %v259 = vrot.slane %v250, %v258
    %262 = vmatprep.subr.mxu0 %v217
    %263 = vmatpush1.msra.mxu0 %v216
    %264 = vmatprep.subr.mxu0 %v215
    %265 = vmatpush1.msra.mxu0 %v214
    %266 = vmatprep.subr.mxu0 %v213
    %267 = vmatpush1.msra.mxu0 %v212
    %268 = vmatprep.subr.mxu0 %v211
    %269 = vmatpush1.msra.mxu0 %v210
    %270 = vmatprep.subr.mxu0 %v209
    %271 = vmatpush1.msra.mxu0 %v208
    %272 = vmatprep.subr.mxu0 %v207
    %273 = vmatpush1.msra.mxu0 %v206
    %274 = vmatprep.subr.mxu0 %v205
    %275 = vmatpush1.msra.mxu0 %v204
    %276 = vmatprep.subr.mxu0 %v203
    %277 = vmatpush1.msra.mxu0 %v202
    %278 = vmatprep.subr.mxu0 %v201
    %279 = vmatpush1.msra.mxu0 %v200
    %280 = vmatprep.subr.mxu0 %v199
    %281 = vmatpush1.msra.mxu0 %v198
    %282 = vmatprep.subr.mxu0 %v197
    %283 = vmatpush1.msra.mxu0 %v196
    %284 = vmatprep.subr.mxu0 %v195
    %285 = vmatpush1.msra.mxu0 %v194
    %286 = vmatprep.subr.mxu0 %v193
    %287 = vmatpush1.msra.mxu0 %v192
    %288 = vmatprep.subr.mxu0 %v191
    %289 = vmatpush1.msra.mxu0 %v190
    %290 = vmatprep.subr.mxu0 %v189
    %291 = vmatpush1.msra.mxu0 %v188
    %292 = vmatprep.subr.mxu0 %v187
    %293 = vmatpush1.msra.mxu0 %v186
    %294 = vmatprep.subr.mxu0 %v249
    %295 = vmatpush2.msra.mxu0 %v248
    %296 = vmatprep.subr.mxu0 %v247
    %297 = vmatpush2.msra.mxu0 %v246
    %298 = vmatprep.subr.mxu0 %v245
    %299 = vmatpush2.msra.mxu0 %v244
    %300 = vmatprep.subr.mxu0 %v243
    %301 = vmatpush2.msra.mxu0 %v242
    %302 = vmatprep.subr.mxu0 %v241
    %303 = vmatpush2.msra.mxu0 %v240
    %304 = vmatprep.subr.mxu0 %v239
    %305 = vmatpush2.msra.mxu0 %v238
    %306 = vmatprep.subr.mxu0 %v237
    %307 = vmatpush2.msra.mxu0 %v236
    %308 = vmatprep.subr.mxu0 %v235
    %309 = vmatpush2.msra.mxu0 %v234
    %310 = vmatprep.subr.mxu0 %v233
    %311 = vmatpush2.msra.mxu0 %v232
    %312 = vmatprep.subr.mxu0 %v231
    %313 = vmatpush2.msra.mxu0 %v230
    %314 = vmatprep.subr.mxu0 %v229
    %315 = vmatpush2.msra.mxu0 %v228
    %316 = vmatprep.subr.mxu0 %v227
    %317 = vmatpush2.msra.mxu0 %v226
    %318 = vmatprep.subr.mxu0 %v225
    %319 = vmatpush2.msra.mxu0 %v224
    %320 = vmatprep.subr.mxu0 %v223
    %321 = vmatpush2.msra.mxu0 %v222
    %322 = vmatprep.subr.mxu0 %v221
    %323 = vmatpush2.msra.mxu0 %v220
    %324 = vmatprep.subr.mxu0 %v219
    %325 = vmatpush2.msra.mxu0 %v218
    %326 = vmatprep.mubr.f32.mxu0 %v185
    %327 = vmatmul.mubr.f32.gmra.mxu0 %v184
    %v328 = vpop.f32.mrf.mxu0
    %v329 = vadd.f32 %v255, %v328
    %v330 = vpop.f32.mrf.mxu0
    %v331 = vadd.f32 %v259, %v330
    %332 = vdwg.mxu0
    %v335 = vcombine.low %v329, %v331
    %v337 = vunpack.c.l.s4 1966171168
    %v338 = vunpack.c.0.s8 %v337
    %v339 = vlaneseq
    %v340 = vshrl.u32 %v339, 7
    %v341 = vsub.s32 %v338, %v340
    %v342 = vrot.slane %v335, %v341
    %v344 = vunpack.c.l.s4 1966171168
    %v345 = vunpack.c.0.s8 %v344
    %v346 = vlaneseq
    %v347 = vshrl.u32 %v346, 7
    %v348 = vsub.s32 %v345, %v347
    %v349 = vrot.slane %v342, %v348
    %v351 = vlaneseq
    %vm352 = vcmp.ge.s32.totalorder %v351, 0
    %vm353 = vcmp.lt.s32.totalorder %v351, 256
    %vm354 = vmand %vm352, %vm353
    %355 = vst.msk [vmem:[#allocation8] sm:$0x3] %vm354, %v349
    // Predicated region
    $region34: #{tpu_custom_call.1} parent=1 // pred_check
      _
    $region35: #{tpu_custom_call.1} parent=1 // pred_check_branch
      %357 = sbr.rel (0) target = $region37
    $region36: #{tpu_custom_call.1} parent=1 // pred_region
      %s359 = ssub.s32 32, 32
      %360 = vsyncadd [#allocation4], %s359
      %s362 = sshll.u32 [#allocation8], 4
      %s363 = int_to_ptr.vmem [resolvable:$true] %s362
      %365 = dma.vmem_to_hbm [thread:$0]  %s363, 32, %s5, [#allocation4]
    $region37: #{tpu_custom_call.1} parent=1 // pred_fallthru
      _
    // Predicated region
    $region38: #{tpu_custom_call.1} parent=1 // pred_check
      _
    $region39: #{tpu_custom_call.1} parent=1 // pred_check_branch
      %367 = sbr.rel (0) target = $region41
    $region40: #{tpu_custom_call.1} parent=1 // pred_region
      %368 = dma.done [#allocation4], 32
    $region41: #{tpu_custom_call.1} parent=1 // pred_fallthru
      _
    %369 = vsyncpa [#allocation3], 1
    %370 = vsyncpa [#allocation6], 1
    %371 = vsyncpa [#allocation4], 1

</llo_original>
